<compile_context>
chip_gen: v7x
topology: tpu7x:2x2x1
jax: 0.10.0
libtpu: 0.0.40
codegen_flags: <defaults>
</compile_context>

<pallas_src>
import functools

import jax
import jax.numpy as jnp
from jax.experimental import pallas as pl
from jax.experimental.pallas import tpu as pltpu


def _round_up(n: int, m: int) -> int:
    return ((n + m - 1) // m) * m


# --------------------------------------------------------------------------- kernel
def _mlp_sigmoid_bias_kernel(x_ref, w0_ref, b0_ref, w1_ref, b1_ref, w2_ref, b2_ref,
                             o_ref):
    """One batch tile of the fused 3-layer MLP. Weights/biases are VMEM-resident."""

    def sigmoid(z):
        # sigmoid(z) == 0.5 * (tanh(z/2) + 1): a single EUP op per element.
        return 0.5 * jnp.tanh(0.5 * z) + 0.5

    # bf16 operands for the MXU, f32 accumulation.
    x = x_ref[...].astype(jnp.bfloat16)
    z0 = jnp.dot(x, w0_ref[...], preferred_element_type=jnp.float32) + b0_ref[...]
    h0 = sigmoid(z0).astype(jnp.bfloat16)
    z1 = jnp.dot(h0, w1_ref[...], preferred_element_type=jnp.float32) + b1_ref[...]
    h1 = sigmoid(z1).astype(jnp.bfloat16)
    out = jnp.dot(h1, w2_ref[...], preferred_element_type=jnp.float32) + b2_ref[...]
    o_ref[...] = out.astype(o_ref.dtype)


# --------------------------------------------------------------------- VMEM budgeting
_VMEM_TARGET = 40 << 20   # keep well under v7x's 64 MiB per-TensorCore VMEM


def _vmem_bytes(tm, in_p, wid_p, out_p):
    weights = (in_p * wid_p + wid_p * wid_p + wid_p * out_p) * 2   # bf16, single copy
    biases = (2 * wid_p + out_p) * 4                               # f32
    x_blocks = 2 * tm * in_p * 4          # double-buffered input tiles (f32 worst case)
    out_blocks = 2 * tm * out_p * 4       # double-buffered f32 output tiles
    intermediates = 6 * tm * wid_p * 4    # z/h temporaries + headroom
    return weights + biases + x_blocks + out_blocks + intermediates


def _select_tm(batch, in_p, wid_p, out_p):
    batch8 = _round_up(batch, 8)
    tm = 1024
    while tm > 128 and _vmem_bytes(tm, in_p, wid_p, out_p) > _VMEM_TARGET:
        tm //= 2
    return min(tm, batch8)


# ------------------------------------------------------------------------- forward
@functools.partial(jax.jit, static_argnames=("num_classes",))
def fully_connected_bias_forward(x, w0p, b0p, w1p, b1p, w2p, b2p, *, num_classes):
    """Forward pass of FullyConnected_bias (depth=3).

    x                : (batch, C, H, W) or (batch, input_dim)
    w*p, b*p         : padded params from prepare_params (bf16 weights, f32 biases)
    num_classes      : true (unpadded) number of output classes (static)
    """
    batch = x.shape[0]
    x2d = x.reshape(batch, -1)
    if x2d.dtype not in (jnp.float32, jnp.bfloat16):
        x2d = x2d.astype(jnp.float32)

    input_dim = x2d.shape[1]
    in_p = w0p.shape[0]
    wid_p = w0p.shape[1]
    out_p = w2p.shape[1]
    if input_dim > in_p:
        raise ValueError(f"input_dim {input_dim} exceeds padded weight rows {in_p}")

    TM = _select_tm(batch, in_p, wid_p, out_p)
    batch_p = _round_up(batch, TM)

    # Only copy x in HBM if padding is actually required; fuse the bf16 cast into
    # that copy so the kernel-side x stream is halved.  Otherwise pass x untouched
    # (the kernel casts to bf16 on the fly — no extra HBM round trip).
    if batch_p != batch or in_p != input_dim:
        x2d = jnp.pad(x2d.astype(jnp.bfloat16),
                      ((0, batch_p - batch), (0, in_p - input_dim)))

    grid = (batch_p // TM,)

    # Weights/biases: whole-array resident in VMEM (single copy, no double-buffering).
    resident = pl.BlockSpec(memory_space=pltpu.MemorySpace.VMEM)

    vmem_limit = min(
        max(int(1.25 * _vmem_bytes(TM, in_p, wid_p, out_p)) + (2 << 20), 32 << 20),
        64 << 20)

    out_padded = pl.pallas_call(
        _mlp_sigmoid_bias_kernel,
        out_shape=jax.ShapeDtypeStruct((batch_p, out_p), jnp.float32),
        grid=grid,
        in_specs=[
            pl.BlockSpec((TM, in_p), lambda i: (i, 0)),   # pipelined x tiles
            resident, resident,                           # W0, b0
            resident, resident,                           # W1, b1
            resident, resident,                           # W2, b2
        ],
        out_specs=pl.BlockSpec((TM, out_p), lambda i: (i, 0)),
        compiler_params=pltpu.CompilerParams(
            dimension_semantics=("parallel",),   # shards batch tiles across TCs on v7x
            vmem_limit_bytes=vmem_limit,
        ),
    )(x2d, w0p, b0p, w1p, b1p, w2p, b2p)

    return out_padded[:batch, :num_classes]


# ---------------------------------------------------------------------- param prep
def prepare_params(w0_t, b0, w1_t, b1, w2_t, b2):
    """Pad to lane-friendly sizes and cast ONCE, outside the jitted forward.

    Weights are transposed (in_features, out_features).  Padded weight ROWS are
    zero, so sigmoid(0)=0.5 values in padded hidden lanes never reach real outputs.
    Returns ((w0p, b0p, w1p, b1p, w2p, b2p), num_classes).
    """
    input_dim, width = w0_t.shape
    num_classes = w2_t.shape[1]
    in_p = _round_up(input_dim, 128)
    wid_p = _round_up(width, 128)
    out_p = _round_up(num_classes, 128)

    w0p = jnp.pad(w0_t.astype(jnp.bfloat16),
                  ((0, in_p - input_dim), (0, wid_p - width)))
    w1p = jnp.pad(w1_t.astype(jnp.bfloat16),
                  ((0, wid_p - width), (0, wid_p - width)))
    w2p = jnp.pad(w2_t.astype(jnp.bfloat16),
                  ((0, wid_p - width), (0, out_p - num_classes)))
    b0p = jnp.pad(b0.astype(jnp.float32), (0, wid_p - width)).reshape(1, wid_p)
    b1p = jnp.pad(b1.astype(jnp.float32), (0, wid_p - width)).reshape(1, wid_p)
    b2p = jnp.pad(b2.astype(jnp.float32), (0, out_p - num_classes)).reshape(1, out_p)
    return (w0p, b0p, w1p, b1p, w2p, b2p), num_classes


def init_params(key, input_dim, width, num_classes):
    """Mimics nn.Linear's U(-1/sqrt(fan_in), 1/sqrt(fan_in)) init for W and b.

    Returns f32 transposed weights (in_features, out_features) plus biases.
    """
    keys = jax.random.split(key, 6)

    def lin(kw, kb, fan_in, fan_out):
        bound = 1.0 / jnp.sqrt(fan_in)
        w_t = jax.random.uniform(kw, (fan_in, fan_out), dtype=jnp.float32,
                                 minval=-bound, maxval=bound)
        b = jax.random.uniform(kb, (fan_out,), dtype=jnp.float32,
                               minval=-bound, maxval=bound)
        return w_t, b

    w0_t, b0 = lin(keys[0], keys[1], input_dim, width)    # Linear(input_dim -> width)
    w1_t, b1 = lin(keys[2], keys[3], width, width)        # depth=3 -> one hidden layer
    w2_t, b2 = lin(keys[4], keys[5], width, num_classes)  # Linear(width -> num_classes)
    return w0_t, b0, w1_t, b1, w2_t, b2


if __name__ == "__main__":
    # Small shapes consistent with the module (depth=3 MLP over a flattened image).
    batch, channels, H, W = 4, 1, 16, 16
    input_dim = channels * H * W          # 256
    width = 32
    num_classes = 10

    key = jax.random.PRNGKey(0)
    kx, kp = jax.random.split(key)
    x = jax.random.normal(kx, (batch, channels, H, W), dtype=jnp.float32)

    w0_t, b0, w1_t, b1, w2_t, b2 = init_params(kp, input_dim, width, num_classes)
    padded_params, n_cls = prepare_params(w0_t, b0, w1_t, b1, w2_t, b2)

    out = fully_connected_bias_forward(x, *padded_params, num_classes=n_cls)
    out = jax.block_until_ready(out)

    # f32 reference (same math as the PyTorch forward). Kernel uses bf16 MXU
    # operands with f32 accumulation, so tolerance is loosened accordingly.
    x2d = x.reshape(batch, input_dim)
    ref = jax.nn.sigmoid(x2d @ w0_t + b0)
    ref = jax.nn.sigmoid(ref @ w1_t + b1)
    ref = ref @ w2_t + b2

    assert out.shape == (batch, num_classes)
    max_err = float(jnp.max(jnp.abs(out - ref)))
    assert jnp.allclose(out, ref, atol=2e-2, rtol=2e-2), f"max abs err {max_err}"

    print("KERNEL_OK")
</pallas_src>

<mosaic_0001>
module attributes {stable_mosaic.version = 11 : i64} {
  func.func @_mlp_sigmoid_bias_kernel(%arg0: i32, %arg1: memref<8x256xbf16, #tpu.memory_space<vmem>>, %arg2: memref<256x128xbf16, #tpu.memory_space<vmem>>, %arg3: memref<1x128xf32, #tpu.memory_space<vmem>>, %arg4: memref<128x128xbf16, #tpu.memory_space<vmem>>, %arg5: memref<1x128xf32, #tpu.memory_space<vmem>>, %arg6: memref<128x128xbf16, #tpu.memory_space<vmem>>, %arg7: memref<1x128xf32, #tpu.memory_space<vmem>>, %arg8: memref<8x128xf32, #tpu.memory_space<vmem>>) attributes {dimension_semantics = [#tpu.dimension_semantics<parallel>], iteration_bounds = array<i64: 1>, scalar_prefetch = 0 : i64, scratch_operands = 0 : i64, tpu.core_type = #tpu.core_type<tc>, window_params = [{transform_indices = @transform_0, window_bounds = array<i64: 8, 256>}, {pipeline_mode = #tpu.pipeline_mode<synchronous>, transform_indices = @transform_1, window_bounds = array<i64: 256, 128>}, {pipeline_mode = #tpu.pipeline_mode<synchronous>, transform_indices = @transform_2, window_bounds = array<i64: 1, 128>}, {pipeline_mode = #tpu.pipeline_mode<synchronous>, transform_indices = @transform_3, window_bounds = array<i64: 128, 128>}, {pipeline_mode = #tpu.pipeline_mode<synchronous>, transform_indices = @transform_4, window_bounds = array<i64: 1, 128>}, {pipeline_mode = #tpu.pipeline_mode<synchronous>, transform_indices = @transform_5, window_bounds = array<i64: 128, 128>}, {pipeline_mode = #tpu.pipeline_mode<synchronous>, transform_indices = @transform_6, window_bounds = array<i64: 1, 128>}, {transform_indices = @transform_7, window_bounds = array<i64: 8, 128>}]} {
    %c0 = arith.constant 0 : index
    %c0_0 = arith.constant 0 : index
    %0 = vector.load %arg1[%c0, %c0_0] : memref<8x256xbf16, #tpu.memory_space<vmem>>, vector<8x256xbf16>
    %c0_1 = arith.constant 0 : index
    %c0_2 = arith.constant 0 : index
    %1 = vector.load %arg2[%c0_1, %c0_2] : memref<256x128xbf16, #tpu.memory_space<vmem>>, vector<256x128xbf16>
    %cst = arith.constant dense<0.000000e+00> : vector<8x128xf32>
    %2 = tpu.matmul %0, %1, %cst {dimension_numbers = #tpu.dot_dimension_numbers<[1], [0], [0], [1], [0, 0, 1, 1], [], []>} : vector<8x256xbf16>, vector<256x128xbf16>, vector<8x128xf32> -> vector<8x128xf32>
    %c0_3 = arith.constant 0 : index
    %c0_4 = arith.constant 0 : index
    %3 = vector.load %arg3[%c0_3, %c0_4] : memref<1x128xf32, #tpu.memory_space<vmem>>, vector<1x128xf32>
    %4 = vector.broadcast %3 : vector<1x128xf32> to vector<8x128xf32>
    %5 = arith.addf %2, %4 : vector<8x128xf32>
    %cst_5 = arith.constant 5.000000e-01 : f32
    %6 = vector.broadcast %cst_5 : f32 to vector<8x128xf32>
    %7 = arith.mulf %6, %5 : vector<8x128xf32>
    %8 = math.tanh %7 : vector<8x128xf32>
    %cst_6 = arith.constant 5.000000e-01 : f32
    %9 = vector.broadcast %cst_6 : f32 to vector<8x128xf32>
    %10 = arith.mulf %9, %8 : vector<8x128xf32>
    %cst_7 = arith.constant 5.000000e-01 : f32
    %11 = vector.broadcast %cst_7 : f32 to vector<8x128xf32>
    %12 = arith.addf %10, %11 : vector<8x128xf32>
    %13 = arith.truncf %12 : vector<8x128xf32> to vector<8x128xbf16>
    %c0_8 = arith.constant 0 : index
    %c0_9 = arith.constant 0 : index
    %14 = vector.load %arg4[%c0_8, %c0_9] : memref<128x128xbf16, #tpu.memory_space<vmem>>, vector<128x128xbf16>
    %cst_10 = arith.constant dense<0.000000e+00> : vector<8x128xf32>
    %15 = tpu.matmul %13, %14, %cst_10 {dimension_numbers = #tpu.dot_dimension_numbers<[1], [0], [0], [1], [0, 0, 1, 1], [], []>} : vector<8x128xbf16>, vector<128x128xbf16>, vector<8x128xf32> -> vector<8x128xf32>
    %c0_11 = arith.constant 0 : index
    %c0_12 = arith.constant 0 : index
    %16 = vector.load %arg5[%c0_11, %c0_12] : memref<1x128xf32, #tpu.memory_space<vmem>>, vector<1x128xf32>
    %17 = vector.broadcast %16 : vector<1x128xf32> to vector<8x128xf32>
    %18 = arith.addf %15, %17 : vector<8x128xf32>
    %cst_13 = arith.constant 5.000000e-01 : f32
    %19 = vector.broadcast %cst_13 : f32 to vector<8x128xf32>
    %20 = arith.mulf %19, %18 : vector<8x128xf32>
    %21 = math.tanh %20 : vector<8x128xf32>
    %cst_14 = arith.constant 5.000000e-01 : f32
    %22 = vector.broadcast %cst_14 : f32 to vector<8x128xf32>
    %23 = arith.mulf %22, %21 : vector<8x128xf32>
    %cst_15 = arith.constant 5.000000e-01 : f32
    %24 = vector.broadcast %cst_15 : f32 to vector<8x128xf32>
    %25 = arith.addf %23, %24 : vector<8x128xf32>
    %26 = arith.truncf %25 : vector<8x128xf32> to vector<8x128xbf16>
    %c0_16 = arith.constant 0 : index
    %c0_17 = arith.constant 0 : index
    %27 = vector.load %arg6[%c0_16, %c0_17] : memref<128x128xbf16, #tpu.memory_space<vmem>>, vector<128x128xbf16>
    %cst_18 = arith.constant dense<0.000000e+00> : vector<8x128xf32>
    %28 = tpu.matmul %26, %27, %cst_18 {dimension_numbers = #tpu.dot_dimension_numbers<[1], [0], [0], [1], [0, 0, 1, 1], [], []>} : vector<8x128xbf16>, vector<128x128xbf16>, vector<8x128xf32> -> vector<8x128xf32>
    %c0_19 = arith.constant 0 : index
    %c0_20 = arith.constant 0 : index
    %29 = vector.load %arg7[%c0_19, %c0_20] : memref<1x128xf32, #tpu.memory_space<vmem>>, vector<1x128xf32>
    %30 = vector.broadcast %29 : vector<1x128xf32> to vector<8x128xf32>
    %31 = arith.addf %28, %30 : vector<8x128xf32>
    %c0_21 = arith.constant 0 : index
    %c0_22 = arith.constant 0 : index
    %32 = vector.load %arg8[%c0_21, %c0_22] : memref<8x128xf32, #tpu.memory_space<vmem>>, vector<8x128xf32>
    tpu.vector_store %arg8[%c0_21, %c0_22], %31 {strides = array<i32>} : memref<8x128xf32, #tpu.memory_space<vmem>>, vector<8x128xf32>,
    return
  }
  func.func @transform_0(%arg0: i32) -> (i32, i32) {
    %c0_i32 = arith.constant 0 : i32
    %c0_i32_0 = arith.constant 0 : i32
    return %arg0, %c0_i32 : i32, i32
  }
  func.func @transform_1(%arg0: i32) -> (i32, i32) {
    %c0_i32 = arith.constant 0 : i32
    %c0_i32_0 = arith.constant 0 : i32
    %c0_i32_1 = arith.constant 0 : i32
    return %c0_i32, %c0_i32_0 : i32, i32
  }
  func.func @transform_2(%arg0: i32) -> (i32, i32) {
    %c0_i32 = arith.constant 0 : i32
    %c0_i32_0 = arith.constant 0 : i32
    %c0_i32_1 = arith.constant 0 : i32
    return %c0_i32, %c0_i32_0 : i32, i32
  }
  func.func @transform_3(%arg0: i32) -> (i32, i32) {
    %c0_i32 = arith.constant 0 : i32
    %c0_i32_0 = arith.constant 0 : i32
    %c0_i32_1 = arith.constant 0 : i32
    return %c0_i32, %c0_i32_0 : i32, i32
  }
  func.func @transform_4(%arg0: i32) -> (i32, i32) {
    %c0_i32 = arith.constant 0 : i32
    %c0_i32_0 = arith.constant 0 : i32
    %c0_i32_1 = arith.constant 0 : i32
    return %c0_i32, %c0_i32_0 : i32, i32
  }
  func.func @transform_5(%arg0: i32) -> (i32, i32) {
    %c0_i32 = arith.constant 0 : i32
    %c0_i32_0 = arith.constant 0 : i32
    %c0_i32_1 = arith.constant 0 : i32
    return %c0_i32, %c0_i32_0 : i32, i32
  }
  func.func @transform_6(%arg0: i32) -> (i32, i32) {
    %c0_i32 = arith.constant 0 : i32
    %c0_i32_0 = arith.constant 0 : i32
    %c0_i32_1 = arith.constant 0 : i32
    return %c0_i32, %c0_i32_0 : i32, i32
  }
  func.func @transform_7(%arg0: i32) -> (i32, i32) {
    %c0_i32 = arith.constant 0 : i32
    %c0_i32_0 = arith.constant 0 : i32
    return %arg0, %c0_i32 : i32, i32
  }
}

</mosaic_0001>

<llo_original>
// kernel: fully_connected_bias_forward.1
$region0: #{fully_connected_bias_forward.1}
  #allocation0 [shape = 'u32[]', space=smem, size = 0x4, offset = 0x4, fixed_abs, tag = 'smem constant byte address 0x4 - core index']
  #allocation1 [shape = 'u32[144,128]{1,0:T(1,128)}', space=vmem, size = 0x12000, scoped, tag = 'internal scratch']
  %s0 = inlined_call_operand.vmem [shape: bf16[8,256], index: 0, kind: input, shape index: {}]
  %s1 = inlined_call_operand.vmem [shape: bf16[256,128], index: 1, kind: input, shape index: {}]
  %s2 = inlined_call_operand.vmem [shape: f32[1,128], index: 2, kind: input, shape index: {}]
  %s3 = inlined_call_operand.hbm [shape: bf16[128,128], index: 3, kind: input, shape index: {}]
  %s4 = inlined_call_operand.vmem [shape: f32[1,128], index: 4, kind: input, shape index: {}]
  %s5 = inlined_call_operand.hbm [shape: bf16[128,128], index: 5, kind: input, shape index: {}]
  %s6 = inlined_call_operand.vmem [shape: f32[1,128], index: 6, kind: input, shape index: {}]
  %s7 = inlined_call_operand.vmem [shape: f32[8,128], index: 7, kind: output, shape index: {}]
  %s8 = sld [smem:[#allocation0]]
  $region46: #{fully_connected_bias_forward.1} parent=0
    _
  %s10 = ssub.s32 1, %s8
  %s11 = scalar_select 0, %s10, %s8
  $region1: #{fully_connected_bias_forward.1} parent=0
    #allocation2 [shape = 'u8[32768]{0}', space=vmem, size = 0x8000, scoped, tag = 'input window, operand 3, single buffered']
    #allocation3 [shape = 's32[1]{0}', space=sflag, size = 0x4, scoped, tag = 'scoped memory for fully_connected_bias_forward.1']
    #allocation4 [shape = 'u8[32768]{0}', space=vmem, size = 0x8000, scoped, tag = 'input window, operand 5, single buffered']
    #allocation5 [shape = 's32[1]{0}', space=sflag, size = 0x4, scoped, tag = 'scoped memory for fully_connected_bias_forward.1']
    %12 = vsyncpa [#allocation3], 0
    %13 = vsyncpa [#allocation5], 0
    // Predicated region
    $region2: #{fully_connected_bias_forward.1} parent=1 // pred_check
      _
    $region3: #{fully_connected_bias_forward.1} parent=1 // pred_check_branch
      %15 = sbr.rel (0) target = $region5
    $region4: #{fully_connected_bias_forward.1} parent=1 // pred_region
      _
    $region5: #{fully_connected_bias_forward.1} parent=1 // pred_fallthru
      _
    // Predicated region
    $region6: #{fully_connected_bias_forward.1} parent=1 // pred_check
      _
    $region7: #{fully_connected_bias_forward.1} parent=1 // pred_check_branch
      %17 = sbr.rel (0) target = $region9
    $region8: #{fully_connected_bias_forward.1} parent=1 // pred_region
      _
    $region9: #{fully_connected_bias_forward.1} parent=1 // pred_fallthru
      _
    // Predicated region
    $region10: #{fully_connected_bias_forward.1} parent=1 // pred_check
      _
    $region11: #{fully_connected_bias_forward.1} parent=1 // pred_check_branch
      %19 = sbr.rel (0) target = $region13
    $region12: #{fully_connected_bias_forward.1} parent=1 // pred_region
      _
    $region13: #{fully_connected_bias_forward.1} parent=1 // pred_fallthru
      _
    // Predicated region
    $region14: #{fully_connected_bias_forward.1} parent=1 // pred_check
      _
    $region15: #{fully_connected_bias_forward.1} parent=1 // pred_check_branch
      %21 = sbr.rel (0) target = $region17
    $region16: #{fully_connected_bias_forward.1} parent=1 // pred_region
      %s23 = ssub.s32 1024, 1024
      %24 = vsyncadd [#allocation3], %s23
      %s25 = sshll.u32 [#allocation2], 4
      %s26 = int_to_ptr.vmem [resolvable:$true] %s25
      %31 = dma.hbm_to_vmem [thread:$0]  %s3, 1024, %s26, [#allocation3], 64, 64, 4
    $region17: #{fully_connected_bias_forward.1} parent=1 // pred_fallthru
      _
    // Predicated region
    $region18: #{fully_connected_bias_forward.1} parent=1 // pred_check
      _
    $region19: #{fully_connected_bias_forward.1} parent=1 // pred_check_branch
      %33 = sbr.rel (0) target = $region21
    $region20: #{fully_connected_bias_forward.1} parent=1 // pred_region
      _
    $region21: #{fully_connected_bias_forward.1} parent=1 // pred_fallthru
      _
    // Predicated region
    $region22: #{fully_connected_bias_forward.1} parent=1 // pred_check
      _
    $region23: #{fully_connected_bias_forward.1} parent=1 // pred_check_branch
      %35 = sbr.rel (0) target = $region25
    $region24: #{fully_connected_bias_forward.1} parent=1 // pred_region
      %s37 = ssub.s32 1024, 1024
      %38 = vsyncadd [#allocation5], %s37
      %s39 = sshll.u32 [#allocation4], 4
      %s40 = int_to_ptr.vmem [resolvable:$true] %s39
      %45 = dma.hbm_to_vmem [thread:$0]  %s5, 1024, %s40, [#allocation5], 64, 64, 4
    $region25: #{fully_connected_bias_forward.1} parent=1 // pred_fallthru
      _
    // Predicated region
    $region26: #{fully_connected_bias_forward.1} parent=1 // pred_check
      _
    $region27: #{fully_connected_bias_forward.1} parent=1 // pred_check_branch
      %47 = sbr.rel (0) target = $region29
    $region28: #{fully_connected_bias_forward.1} parent=1 // pred_region
      _
    $region29: #{fully_connected_bias_forward.1} parent=1 // pred_fallthru
      _
    // Predicated region
    $region30: #{fully_connected_bias_forward.1} parent=1 // pred_check
      _
    $region31: #{fully_connected_bias_forward.1} parent=1 // pred_check_branch
      %49 = sbr.rel (0) target = $region33
    $region32: #{fully_connected_bias_forward.1} parent=1 // pred_region
      %50 = dma.done [#allocation3], 1024
    $region33: #{fully_connected_bias_forward.1} parent=1 // pred_fallthru
      _
    // Predicated region
    $region34: #{fully_connected_bias_forward.1} parent=1 // pred_check
      _
    $region35: #{fully_connected_bias_forward.1} parent=1 // pred_check_branch
      %52 = sbr.rel (0) target = $region37
    $region36: #{fully_connected_bias_forward.1} parent=1 // pred_region
      %53 = dma.done [#allocation5], 1024
    $region37: #{fully_connected_bias_forward.1} parent=1 // pred_fallthru
      _
    %v55 = vld [vmem:[%s0] sm:$0xff]
    %v56 = vld [vmem:[%s1] sm:$0xf]
    %v57 = vld [vmem:[%s1 + $0x4] sm:$0xf]
    %v58 = vld [vmem:[%s1 + $0x8] sm:$0xf]
    %v59 = vld [vmem:[%s1 + $0xc] sm:$0xf]
    %v60 = vld [vmem:[%s1 + $0x10] sm:$0xf]
    %v61 = vld [vmem:[%s1 + $0x14] sm:$0xf]
    %v62 = vld [vmem:[%s1 + $0x18] sm:$0xf]
    %v63 = vld [vmem:[%s1 + $0x1c] sm:$0xf]
    %v64 = vld [vmem:[%s1 + $0x20] sm:$0xf]
    %v65 = vld [vmem:[%s1 + $0x24] sm:$0xf]
    %v66 = vld [vmem:[%s1 + $0x28] sm:$0xf]
    %v67 = vld [vmem:[%s1 + $0x2c] sm:$0xf]
    %v68 = vld [vmem:[%s1 + $0x30] sm:$0xf]
    %v69 = vld [vmem:[%s1 + $0x34] sm:$0xf]
    %v70 = vld [vmem:[%s1 + $0x38] sm:$0xf]
    %v71 = vld [vmem:[%s1 + $0x3c] sm:$0xf]
    %v72 = vld [vmem:[%s1 + $0x40] sm:$0xf]
    %v73 = vld [vmem:[%s1 + $0x44] sm:$0xf]
    %v74 = vld [vmem:[%s1 + $0x48] sm:$0xf]
    %v75 = vld [vmem:[%s1 + $0x4c] sm:$0xf]
    %v76 = vld [vmem:[%s1 + $0x50] sm:$0xf]
    %v77 = vld [vmem:[%s1 + $0x54] sm:$0xf]
    %v78 = vld [vmem:[%s1 + $0x58] sm:$0xf]
    %v79 = vld [vmem:[%s1 + $0x5c] sm:$0xf]
    %v80 = vld [vmem:[%s1 + $0x60] sm:$0xf]
    %v81 = vld [vmem:[%s1 + $0x64] sm:$0xf]
    %v82 = vld [vmem:[%s1 + $0x68] sm:$0xf]
    %v83 = vld [vmem:[%s1 + $0x6c] sm:$0xf]
    %v84 = vld [vmem:[%s1 + $0x70] sm:$0xf]
    %v85 = vld [vmem:[%s1 + $0x74] sm:$0xf]
    %v86 = vld [vmem:[%s1 + $0x78] sm:$0xf]
    %v87 = vld [vmem:[%s1 + $0x7c] sm:$0xf]
    %v88 = vld [vmem:[%s2] sm:$0x1]
    %v90 = vlaneseq
    %v91 = vshrl.u32 %v90, 7
    %v92 = vsub.s32 0, %v91
    %v93 = vrot.slane %v88, %v92
    %v96 = vunpack.c.l.b16 %v55
    %v97 = vunpack.c.h.b16 %v55
    %v98 = vpack.c.b16 %v96, %v96
    %v99 = vpack.c.b16 %v97, %v97
    %v134 = vunpack.c.l.b16 %v56
    %v135 = vunpack.c.l.b16 %v57
    %v136 = vunpack.c.l.b16 %v58
    %v137 = vunpack.c.l.b16 %v59
    %v138 = vunpack.c.l.b16 %v60
    %v139 = vunpack.c.l.b16 %v61
    %v140 = vunpack.c.l.b16 %v62
    %v141 = vunpack.c.l.b16 %v63
    %v142 = vunpack.c.l.b16 %v64
    %v143 = vunpack.c.l.b16 %v65
    %v144 = vunpack.c.l.b16 %v66
    %v145 = vunpack.c.l.b16 %v67
    %v146 = vunpack.c.l.b16 %v68
    %v147 = vunpack.c.l.b16 %v69
    %v148 = vunpack.c.l.b16 %v70
    %v149 = vunpack.c.l.b16 %v71
    %v150 = vunpack.c.l.b16 %v72
    %v151 = vunpack.c.l.b16 %v73
    %v152 = vunpack.c.l.b16 %v74
    %v153 = vunpack.c.l.b16 %v75
    %v154 = vunpack.c.l.b16 %v76
    %v155 = vunpack.c.l.b16 %v77
    %v156 = vunpack.c.l.b16 %v78
    %v157 = vunpack.c.l.b16 %v79
    %v158 = vunpack.c.l.b16 %v80
    %v159 = vunpack.c.l.b16 %v81
    %v160 = vunpack.c.l.b16 %v82
    %v161 = vunpack.c.l.b16 %v83
    %v162 = vunpack.c.l.b16 %v84
    %v163 = vunpack.c.l.b16 %v85
    %v164 = vunpack.c.l.b16 %v86
    %v165 = vunpack.c.l.b16 %v87
    %v166 = vpack.c.b16 %v135, %v134
    %v167 = vpack.c.b16 %v137, %v136
    %v168 = vpack.c.b16 %v139, %v138
    %v169 = vpack.c.b16 %v141, %v140
    %v170 = vpack.c.b16 %v143, %v142
    %v171 = vpack.c.b16 %v145, %v144
    %v172 = vpack.c.b16 %v147, %v146
    %v173 = vpack.c.b16 %v149, %v148
    %v174 = vpack.c.b16 %v151, %v150
    %v175 = vpack.c.b16 %v153, %v152
    %v176 = vpack.c.b16 %v155, %v154
    %v177 = vpack.c.b16 %v157, %v156
    %v178 = vpack.c.b16 %v159, %v158
    %v179 = vpack.c.b16 %v161, %v160
    %v180 = vpack.c.b16 %v163, %v162
    %v181 = vpack.c.b16 %v165, %v164
    %198 = vmatprep.subr.bf16.mxu0 0
    %199 = vmatpush1.bf16.msra.mxu0 %v166
    %200 = vmatprep.subr.bf16.mxu0 0
    %201 = vmatpush1.bf16.msra.mxu0 %v167
    %202 = vmatprep.subr.bf16.mxu0 0
    %203 = vmatpush1.bf16.msra.mxu0 %v168
    %204 = vmatprep.subr.bf16.mxu0 0
    %205 = vmatpush1.bf16.msra.mxu0 %v169
    %206 = vmatprep.subr.bf16.mxu0 0
    %207 = vmatpush1.bf16.msra.mxu0 %v170
    %208 = vmatprep.subr.bf16.mxu0 0
    %209 = vmatpush1.bf16.msra.mxu0 %v171
    %210 = vmatprep.subr.bf16.mxu0 0
    %211 = vmatpush1.bf16.msra.mxu0 %v172
    %212 = vmatprep.subr.bf16.mxu0 0
    %213 = vmatpush1.bf16.msra.mxu0 %v173
    %214 = vmatprep.subr.bf16.mxu0 0
    %215 = vmatpush1.bf16.msra.mxu0 %v174
    %216 = vmatprep.subr.bf16.mxu0 0
    %217 = vmatpush1.bf16.msra.mxu0 %v175
    %218 = vmatprep.subr.bf16.mxu0 0
    %219 = vmatpush1.bf16.msra.mxu0 %v176
    %220 = vmatprep.subr.bf16.mxu0 0
    %221 = vmatpush1.bf16.msra.mxu0 %v177
    %222 = vmatprep.subr.bf16.mxu0 0
    %223 = vmatpush1.bf16.msra.mxu0 %v178
    %224 = vmatprep.subr.bf16.mxu0 0
    %225 = vmatpush1.bf16.msra.mxu0 %v179
    %226 = vmatprep.subr.bf16.mxu0 0
    %227 = vmatpush1.bf16.msra.mxu0 %v180
    %228 = vmatprep.subr.bf16.mxu0 0
    %229 = vmatpush1.bf16.msra.mxu0 %v181
    %230 = vmatprep.mubr.bf16.mxu0 %v99
    %231 = vmatmul.mubr.bf16.gmra.mrb[0].mxu0 %v98
    %v232 = vpop.f32.mrb[0].mxu0
    %v233 = vadd.f32 %v93, %v232
    %v234 = vpop.f32.mrb[0].mxu0
    %v235 = vpop.f32.mrb[0].mxu0
    %v236 = vpop.f32.mrb[0].mxu0
    %237 = vdwg.mxu0
    %v238 = vmul.f32 %v233, 0.5
    %v239 = vtanh.pop %v238
    %v240 = vmul.f32 %v239, 0.5
    %v241 = vadd.f32 %v240, 0.5
    %v242 = vpack.c.bf16 %v241, %v241
    %v243 = vld [vmem:[#allocation2] sm:$0xf]
    %v244 = vld [vmem:[#allocation2 + $0x4] sm:$0xf]
    %v245 = vld [vmem:[#allocation2 + $0x8] sm:$0xf]
    %v246 = vld [vmem:[#allocation2 + $0xc] sm:$0xf]
    %v247 = vld [vmem:[#allocation2 + $0x10] sm:$0xf]
    %v248 = vld [vmem:[#allocation2 + $0x14] sm:$0xf]
    %v249 = vld [vmem:[#allocation2 + $0x18] sm:$0xf]
    %v250 = vld [vmem:[#allocation2 + $0x1c] sm:$0xf]
    %v251 = vld [vmem:[#allocation2 + $0x20] sm:$0xf]
    %v252 = vld [vmem:[#allocation2 + $0x24] sm:$0xf]
    %v253 = vld [vmem:[#allocation2 + $0x28] sm:$0xf]
    %v254 = vld [vmem:[#allocation2 + $0x2c] sm:$0xf]
    %v255 = vld [vmem:[#allocation2 + $0x30] sm:$0xf]
    %v256 = vld [vmem:[#allocation2 + $0x34] sm:$0xf]
    %v257 = vld [vmem:[#allocation2 + $0x38] sm:$0xf]
    %v258 = vld [vmem:[#allocation2 + $0x3c] sm:$0xf]
    %v259 = vld [vmem:[%s4] sm:$0x1]
    %v261 = vlaneseq
    %v262 = vshrl.u32 %v261, 7
    %v263 = vsub.s32 0, %v262
    %v264 = vrot.slane %v259, %v263
    %v282 = vunpack.c.l.b16 %v243
    %v283 = vunpack.c.l.b16 %v244
    %v284 = vunpack.c.l.b16 %v245
    %v285 = vunpack.c.l.b16 %v246
    %v286 = vunpack.c.l.b16 %v247
    %v287 = vunpack.c.l.b16 %v248
    %v288 = vunpack.c.l.b16 %v249
    %v289 = vunpack.c.l.b16 %v250
    %v290 = vunpack.c.l.b16 %v251
    %v291 = vunpack.c.l.b16 %v252
    %v292 = vunpack.c.l.b16 %v253
    %v293 = vunpack.c.l.b16 %v254
    %v294 = vunpack.c.l.b16 %v255
    %v295 = vunpack.c.l.b16 %v256
    %v296 = vunpack.c.l.b16 %v257
    %v297 = vunpack.c.l.b16 %v258
    %v298 = vpack.c.b16 %v283, %v282
    %v299 = vpack.c.b16 %v285, %v284
    %v300 = vpack.c.b16 %v287, %v286
    %v301 = vpack.c.b16 %v289, %v288
    %v302 = vpack.c.b16 %v291, %v290
    %v303 = vpack.c.b16 %v293, %v292
    %v304 = vpack.c.b16 %v295, %v294
    %v305 = vpack.c.b16 %v297, %v296
    %314 = vmatprep.subr.bf16.mxu0 0
    %315 = vmatpush1.bf16.msra.mxu0 %v298
    %316 = vmatprep.subr.bf16.mxu0 0
    %317 = vmatpush1.bf16.msra.mxu0 %v299
    %318 = vmatprep.subr.bf16.mxu0 0
    %319 = vmatpush1.bf16.msra.mxu0 %v300
    %320 = vmatprep.subr.bf16.mxu0 0
    %321 = vmatpush1.bf16.msra.mxu0 %v301
    %322 = vmatprep.subr.bf16.mxu0 0
    %323 = vmatpush1.bf16.msra.mxu0 %v302
    %324 = vmatprep.subr.bf16.mxu0 0
    %325 = vmatpush1.bf16.msra.mxu0 %v303
    %326 = vmatprep.subr.bf16.mxu0 0
    %327 = vmatpush1.bf16.msra.mxu0 %v304
    %328 = vmatprep.subr.bf16.mxu0 0
    %329 = vmatpush1.bf16.msra.mxu0 %v305
    %330 = vmatprep.subr.bf16.mxu0 0
    %331 = vmatpush1.bf16.msra.mxu0 0
    %332 = vmatprep.subr.bf16.mxu0 0
    %333 = vmatpush1.bf16.msra.mxu0 0
    %334 = vmatprep.subr.bf16.mxu0 0
    %335 = vmatpush1.bf16.msra.mxu0 0
    %336 = vmatprep.subr.bf16.mxu0 0
    %337 = vmatpush1.bf16.msra.mxu0 0
    %338 = vmatprep.subr.bf16.mxu0 0
    %339 = vmatpush1.bf16.msra.mxu0 0
    %340 = vmatprep.subr.bf16.mxu0 0
    %341 = vmatpush1.bf16.msra.mxu0 0
    %342 = vmatprep.subr.bf16.mxu0 0
    %343 = vmatpush1.bf16.msra.mxu0 0
    %344 = vmatprep.subr.bf16.mxu0 0
    %345 = vmatpush1.bf16.msra.mxu0 0
    %346 = vmatprep.mubr.bf16.mxu0 0
    %347 = vmatmul.mubr.bf16.gmra.mrb[0].mxu0 %v242
    %v348 = vpop.f32.mrb[0].mxu0
    %v349 = vadd.f32 %v264, %v348
    %v350 = vpop.f32.mrb[0].mxu0
    %v351 = vpop.f32.mrb[0].mxu0
    %v352 = vpop.f32.mrb[0].mxu0
    %353 = vdwg.mxu0
    %v354 = vmul.f32 %v349, 0.5
    %v355 = vtanh.pop %v354
    %v356 = vmul.f32 %v355, 0.5
    %v357 = vadd.f32 %v356, 0.5
    %v358 = vpack.c.bf16 %v357, %v357
    %v359 = vld [vmem:[#allocation4] sm:$0xf]
    %v360 = vld [vmem:[#allocation4 + $0x4] sm:$0xf]
    %v361 = vld [vmem:[#allocation4 + $0x8] sm:$0xf]
    %v362 = vld [vmem:[#allocation4 + $0xc] sm:$0xf]
    %v363 = vld [vmem:[#allocation4 + $0x10] sm:$0xf]
    %v364 = vld [vmem:[#allocation4 + $0x14] sm:$0xf]
    %v365 = vld [vmem:[#allocation4 + $0x18] sm:$0xf]
    %v366 = vld [vmem:[#allocation4 + $0x1c] sm:$0xf]
    %v367 = vld [vmem:[#allocation4 + $0x20] sm:$0xf]
    %v368 = vld [vmem:[#allocation4 + $0x24] sm:$0xf]
    %v369 = vld [vmem:[#allocation4 + $0x28] sm:$0xf]
    %v370 = vld [vmem:[#allocation4 + $0x2c] sm:$0xf]
    %v371 = vld [vmem:[#allocation4 + $0x30] sm:$0xf]
    %v372 = vld [vmem:[#allocation4 + $0x34] sm:$0xf]
    %v373 = vld [vmem:[#allocation4 + $0x38] sm:$0xf]
    %v374 = vld [vmem:[#allocation4 + $0x3c] sm:$0xf]
    %v375 = vld [vmem:[%s6] sm:$0x1]
    %v377 = vlaneseq
    %v378 = vshrl.u32 %v377, 7
    %v379 = vsub.s32 0, %v378
    %v380 = vrot.slane %v375, %v379
    %v398 = vunpack.c.l.b16 %v359
    %v399 = vunpack.c.l.b16 %v360
    %v400 = vunpack.c.l.b16 %v361
    %v401 = vunpack.c.l.b16 %v362
    %v402 = vunpack.c.l.b16 %v363
    %v403 = vunpack.c.l.b16 %v364
    %v404 = vunpack.c.l.b16 %v365
    %v405 = vunpack.c.l.b16 %v366
    %v406 = vunpack.c.l.b16 %v367
    %v407 = vunpack.c.l.b16 %v368
    %v408 = vunpack.c.l.b16 %v369
    %v409 = vunpack.c.l.b16 %v370
    %v410 = vunpack.c.l.b16 %v371
    %v411 = vunpack.c.l.b16 %v372
    %v412 = vunpack.c.l.b16 %v373
    %v413 = vunpack.c.l.b16 %v374
    %v414 = vpack.c.b16 %v399, %v398
    %v415 = vpack.c.b16 %v401, %v400
    %v416 = vpack.c.b16 %v403, %v402
    %v417 = vpack.c.b16 %v405, %v404
    %v418 = vpack.c.b16 %v407, %v406
    %v419 = vpack.c.b16 %v409, %v408
    %v420 = vpack.c.b16 %v411, %v410
    %v421 = vpack.c.b16 %v413, %v412
    %430 = vmatprep.subr.bf16.mxu0 0
    %431 = vmatpush1.bf16.msra.mxu0 %v414
    %432 = vmatprep.subr.bf16.mxu0 0
    %433 = vmatpush1.bf16.msra.mxu0 %v415
    %434 = vmatprep.subr.bf16.mxu0 0
    %435 = vmatpush1.bf16.msra.mxu0 %v416
    %436 = vmatprep.subr.bf16.mxu0 0
    %437 = vmatpush1.bf16.msra.mxu0 %v417
    %438 = vmatprep.subr.bf16.mxu0 0
    %439 = vmatpush1.bf16.msra.mxu0 %v418
    %440 = vmatprep.subr.bf16.mxu0 0
    %441 = vmatpush1.bf16.msra.mxu0 %v419
    %442 = vmatprep.subr.bf16.mxu0 0
    %443 = vmatpush1.bf16.msra.mxu0 %v420
    %444 = vmatprep.subr.bf16.mxu0 0
    %445 = vmatpush1.bf16.msra.mxu0 %v421
    %446 = vmatprep.subr.bf16.mxu0 0
    %447 = vmatpush1.bf16.msra.mxu0 0
    %448 = vmatprep.subr.bf16.mxu0 0
    %449 = vmatpush1.bf16.msra.mxu0 0
    %450 = vmatprep.subr.bf16.mxu0 0
    %451 = vmatpush1.bf16.msra.mxu0 0
    %452 = vmatprep.subr.bf16.mxu0 0
    %453 = vmatpush1.bf16.msra.mxu0 0
    %454 = vmatprep.subr.bf16.mxu0 0
    %455 = vmatpush1.bf16.msra.mxu0 0
    %456 = vmatprep.subr.bf16.mxu0 0
    %457 = vmatpush1.bf16.msra.mxu0 0
    %458 = vmatprep.subr.bf16.mxu0 0
    %459 = vmatpush1.bf16.msra.mxu0 0
    %460 = vmatprep.subr.bf16.mxu0 0
    %461 = vmatpush1.bf16.msra.mxu0 0
    %462 = vmatprep.mubr.bf16.mxu0 0
    %463 = vmatmul.mubr.bf16.gmra.mrb[0].mxu0 %v358
    %v464 = vpop.f32.mrb[0].mxu0
    %v465 = vadd.f32 %v380, %v464
    %v466 = vpop.f32.mrb[0].mxu0
    %v467 = vpop.f32.mrb[0].mxu0
    %v468 = vpop.f32.mrb[0].mxu0
    %469 = vdwg.mxu0
    %470 = vst [vmem:[%s7] sm:$0xff] %v465
    // Predicated region
    $region38: #{fully_connected_bias_forward.1} parent=1 // pred_check
      _
    $region39: #{fully_connected_bias_forward.1} parent=1 // pred_check_branch
      %472 = sbr.rel (0) target = $region41
    $region40: #{fully_connected_bias_forward.1} parent=1 // pred_region
      _
    $region41: #{fully_connected_bias_forward.1} parent=1 // pred_fallthru
      _
    // Predicated region
    $region42: #{fully_connected_bias_forward.1} parent=1 // pred_check
      _
    $region43: #{fully_connected_bias_forward.1} parent=1 // pred_check_branch
      %474 = sbr.rel (0) target = $region45
    $region44: #{fully_connected_bias_forward.1} parent=1 // pred_region
      _
    $region45: #{fully_connected_bias_forward.1} parent=1 // pred_fallthru
      _
    %475 = vsyncpa [#allocation3], 1
    %476 = vsyncpa [#allocation5], 1

</llo_original>
